<compile_context>
chip_gen: v7x
topology: tpu7x:2x2x1
jax: 0.10.0
libtpu: 0.0.40
codegen_flags: <defaults>
</compile_context>

<pallas_src>
import functools
import math
from typing import NamedTuple

import jax
import jax.numpy as jnp
from jax import lax
from jax.experimental import pallas as pl
from jax.experimental.pallas import tpu as pltpu

_INV_SQRT2 = 0.7071067811865476


def _round_up(x, mult):
    return ((x + mult - 1) // mult) * mult


def _vmem_budget_bytes():
    """Usable VMEM per core, leaving headroom for compiler scratch/semaphores."""
    try:
        cap = int(pltpu.get_tpu_info().vmem_capacity_bytes)
    except Exception:
        cap = 128 << 20  # v5e/v6e default if the query is unavailable
    return int(min(cap - (16 << 20), (cap * 4) // 5))


def _estimate_vmem(tm, tn, in_dim, out_itemsize, w_buffers):
    w = w_buffers * (in_dim * 2 * tn * 2 + 2 * tn * 4)   # bf16 weight slab + f32 bias
    x = 2 * tm * in_dim * 4                              # f32 x tile, double-buffered
    o = 2 * tm * tn * out_itemsize                       # output tile, double-buffered
    scratch = tm * in_dim * 2 + 4 * tm * 2 * tn * 4      # bf16 x copy + f32 acc/u/v
    return w + x + o + scratch


def _selective_linear_kernel(x_ref, w_ref, b_ref, o_ref, *, approximate_gelu):
    tn = o_ref.shape[-1]
    # bf16 cast happens in-kernel (no extra HBM pass in the wrapper); single
    # fused MXU matmul over the interleaved [proj | reweight] weight slab.
    acc = jnp.dot(x_ref[...].astype(jnp.bfloat16), w_ref[...],
                  preferred_element_type=jnp.float32)
    acc = acc + b_ref[...]                         # f32 bias add
    u = acc[:, :tn]                                # proj half
    v = acc[:, tn:]                                # reweight half
    if approximate_gelu:
        u = jax.nn.gelu(u, approximate=True)       # tanh path -> EUP slot
    else:
        u = 0.5 * u * (1.0 + lax.erf(u * _INV_SQRT2))   # exact, matches torch GELU
    o_ref[...] = (u * jax.nn.sigmoid(v)).astype(o_ref.dtype)


class PackedParams(NamedTuple):
    w_cat: jax.Array   # [in_dim, 2*n_pad] bf16, per-N-tile interleaved [Wp | Wr]
    b_cat: jax.Array   # [1, 2*n_pad] f32
    in_dim: int
    out_dim: int
    n_pad: int
    tn: int


def pack_selective_linear_params(w_proj, b_proj, w_reweight, b_reweight):
    """Run ONCE per weight set (hoists packing HBM traffic out of the call path).

    w_*: [out_dim, in_dim] (PyTorch nn.Linear layout); b_*: [out_dim].
    """
    out_dim, in_dim = w_proj.shape
    n_pad = _round_up(out_dim, 128)                # lane-dense output stores
    budget = _vmem_budget_bytes()
    w_buffers = 1 if budget < (80 << 20) else 2    # single-buffered weights on v7x

    # Pick tn so the full [in_dim, 2*tn] bf16 slab stays VMEM-resident (grid_n==1)
    # whenever it comfortably fits; otherwise the largest divisor of n_pad.
    candidates = [n_pad] + [t for t in (1024, 512, 256, 128)
                            if t < n_pad and n_pad % t == 0]
    tn = 128
    for cand in candidates:
        if w_buffers * (in_dim * 2 * cand * 2) <= (budget * 3) // 5 or cand == 128:
            tn = cand
            break
    grid_n = n_pad // tn

    # Per N-tile j, columns are [ Wp cols of tile j | Wr cols of tile j ].
    wp_t = jnp.pad(w_proj.T.astype(jnp.float32), ((0, 0), (0, n_pad - out_dim)))
    wr_t = jnp.pad(w_reweight.T.astype(jnp.float32), ((0, 0), (0, n_pad - out_dim)))
    w_cat = jnp.stack(
        [wp_t.reshape(in_dim, grid_n, tn), wr_t.reshape(in_dim, grid_n, tn)],
        axis=2,
    ).reshape(in_dim, 2 * n_pad).astype(jnp.bfloat16)

    bp = jnp.pad(b_proj.astype(jnp.float32), (0, n_pad - out_dim))
    br = jnp.pad(b_reweight.astype(jnp.float32), (0, n_pad - out_dim))
    b_cat = jnp.stack(
        [bp.reshape(grid_n, tn), br.reshape(grid_n, tn)], axis=1
    ).reshape(1, 2 * n_pad).astype(jnp.float32)

    return PackedParams(w_cat=w_cat, b_cat=b_cat, in_dim=in_dim,
                        out_dim=out_dim, n_pad=n_pad, tn=tn)


@functools.partial(
    jax.jit, static_argnames=("out_dim", "tn", "approximate_gelu", "out_dtype"))
def selective_linear(x, w_cat, b_cat, *, out_dim, tn,
                     approximate_gelu=False, out_dtype=None):
    """x: [..., in_dim]; w_cat/b_cat from pack_selective_linear_params."""
    in_dim = x.shape[-1]
    n_pad = w_cat.shape[-1] // 2
    grid_n = n_pad // tn
    lead = x.shape[:-1]
    m = int(math.prod(lead)) if lead else 1
    out_dtype = x.dtype if out_dtype is None else out_dtype
    out_itemsize = jnp.dtype(out_dtype).itemsize
    x_itemsize = jnp.dtype(x.dtype).itemsize

    budget = _vmem_budget_bytes()
    tight_vmem = budget < (80 << 20)               # v7x: 64 MiB VMEM per core
    w_buffers = 1 if tight_vmem else 2

    # M tile: biggest that fits the budget (up to 1024). No jnp.pad of x — the
    # ragged last M block is handled by Pallas and never written back.
    tm = min(1024, _round_up(m, 8))
    while tm > 8 and _estimate_vmem(tm, tn, in_dim, out_itemsize, w_buffers) > budget:
        tm = max(8, _round_up(tm // 2, 8))
    grid_m = pl.cdiv(m, tm)
    # TODO(synk): add a K (in_dim) grid axis + f32 VMEM accumulator for very
    # large in_dim on v7x, where even the smallest full-K tiles exceed 64 MiB.

    x2d = x.reshape(m, in_dim)                     # no pad, no wrapper-side cast

    kernel = functools.partial(_selective_linear_kernel,
                               approximate_gelu=approximate_gelu)

    def _w_spec(block_shape, index_map):
        if tight_vmem:
            # Weight/bias block index only changes on the outer N axis; single
            # buffering frees VMEM headroom on v7x (one exposed DMA per N tile).
            return pl.BlockSpec(block_shape, index_map,
                                pipeline_mode=pl.Buffered(1))
        return pl.BlockSpec(block_shape, index_map)

    if grid_n == 1:
        # 1-D grid over M: megacore (v7x) shards the only >1 parallel axis.
        grid = (grid_m,)
        in_specs = [
            pl.BlockSpec((tm, in_dim), lambda i: (i, 0)),
            _w_spec((in_dim, 2 * tn), lambda i: (0, 0)),
            _w_spec((1, 2 * tn), lambda i: (0, 0)),
        ]
        out_specs = pl.BlockSpec((tm, tn), lambda i: (i, 0))
        dim_sem = ("parallel",)
    else:
        # M innermost: weight/bias tile stays resident while x/out stream.
        grid = (grid_n, grid_m)
        in_specs = [
            pl.BlockSpec((tm, in_dim), lambda j, i: (i, 0)),
            _w_spec((in_dim, 2 * tn), lambda j, i: (0, j)),
            _w_spec((1, 2 * tn), lambda j, i: (0, j)),
        ]
        out_specs = pl.BlockSpec((tm, tn), lambda j, i: (i, j))
        dim_sem = ("parallel", "parallel")

    est = _estimate_vmem(tm, tn, in_dim, out_itemsize, w_buffers)
    vmem_limit = int(min(budget, max(2 * est, 32 << 20)))

    cost = pl.CostEstimate(
        flops=2 * m * in_dim * 2 * n_pad,
        transcendentals=2 * m * n_pad,
        bytes_accessed=(grid_n * m * in_dim * x_itemsize   # x re-streamed per N tile
                        + in_dim * 2 * n_pad * 2           # bf16 weight slab
                        + 2 * n_pad * 4                    # f32 bias
                        + m * n_pad * out_itemsize),       # output writeback
    )

    out = pl.pallas_call(
        kernel,
        out_shape=jax.ShapeDtypeStruct((m, n_pad), out_dtype),
        grid_spec=pltpu.PrefetchScalarGridSpec(
            num_scalar_prefetch=0,
            grid=grid,
            in_specs=in_specs,
            out_specs=out_specs,
        ),
        compiler_params=pltpu.CompilerParams(
            dimension_semantics=dim_sem,
            vmem_limit_bytes=vmem_limit,
        ),
        cost_estimate=cost,
    )(x2d, w_cat, b_cat)

    if n_pad != out_dim:
        out = out[:, :out_dim]
    return out.reshape(*lead, out_dim)


def _init_linear_params(key, in_dim, out_dim):
    # Deterministic init mimicking nn.Linear's uniform(-1/sqrt(in), 1/sqrt(in)).
    kw, kb = jax.random.split(key)
    bound = 1.0 / math.sqrt(in_dim)
    w = jax.random.uniform(kw, (out_dim, in_dim), jnp.float32, -bound, bound)
    b = jax.random.uniform(kb, (out_dim,), jnp.float32, -bound, bound)
    return w, b


if __name__ == "__main__":
    in_dim, out_dim = 32, 32
    batch, seq = 2, 8

    key = jax.random.PRNGKey(0)
    kx, kp, kr = jax.random.split(key, 3)

    x = jax.random.normal(kx, (batch, seq, in_dim), jnp.float32)
    w_proj, b_proj = _init_linear_params(kp, in_dim, out_dim)
    w_rew, b_rew = _init_linear_params(kr, in_dim, out_dim)

    # Pack once (hoisted out of the per-call path), then call the kernel.
    packed = pack_selective_linear_params(w_proj, b_proj, w_rew, b_rew)
    out = selective_linear(x, packed.w_cat, packed.b_cat,
                           out_dim=packed.out_dim, tn=packed.tn)
    jax.block_until_ready(out)

    # Pure-JAX f32 reference (kernel matmul runs in bf16 -> relaxed tolerance).
    u_ref = jax.nn.gelu(x @ w_proj.T + b_proj, approximate=False)
    v_ref = jax.nn.sigmoid(x @ w_rew.T + b_rew)
    ref = u_ref * v_ref
    assert out.shape == (batch, seq, out_dim)
    assert jnp.allclose(out, ref, atol=2e-2, rtol=2e-2), "mismatch vs reference"

    print("KERNEL_OK")
</pallas_src>

<mosaic_0001>
module attributes {stable_mosaic.version = 11 : i64} {
  func.func @_selective_linear_kernel(%arg0: i32, %arg1: memref<16x32xf32, #tpu.memory_space<vmem>>, %arg2: memref<32x256xbf16, #tpu.memory_space<vmem>>, %arg3: memref<1x256xf32, #tpu.memory_space<vmem>>, %arg4: memref<16x128xf32, #tpu.memory_space<vmem>>) attributes {dimension_semantics = [#tpu.dimension_semantics<parallel>], iteration_bounds = array<i64: 1>, scalar_prefetch = 0 : i64, scratch_operands = 0 : i64, tpu.core_type = #tpu.core_type<tc>, window_params = [{transform_indices = @transform_0, window_bounds = array<i64: 16, 32>}, {pipeline_mode = #tpu.pipeline_mode<synchronous>, transform_indices = @transform_1, window_bounds = array<i64: 32, 256>}, {pipeline_mode = #tpu.pipeline_mode<synchronous>, transform_indices = @transform_2, window_bounds = array<i64: 1, 256>}, {transform_indices = @transform_3, window_bounds = array<i64: 16, 128>}]} {
    %c0 = arith.constant 0 : index
    %c0_0 = arith.constant 0 : index
    %0 = vector.load %arg1[%c0, %c0_0] : memref<16x32xf32, #tpu.memory_space<vmem>>, vector<16x32xf32>
    %1 = arith.truncf %0 : vector<16x32xf32> to vector<16x32xbf16>
    %c0_1 = arith.constant 0 : index
    %c0_2 = arith.constant 0 : index
    %2 = vector.load %arg2[%c0_1, %c0_2] : memref<32x256xbf16, #tpu.memory_space<vmem>>, vector<32x256xbf16>
    %cst = arith.constant dense<0.000000e+00> : vector<16x256xf32>
    %3 = tpu.matmul %1, %2, %cst {dimension_numbers = #tpu.dot_dimension_numbers<[1], [0], [0], [1], [0, 0, 1, 1], [], []>} : vector<16x32xbf16>, vector<32x256xbf16>, vector<16x256xf32> -> vector<16x256xf32>
    %c0_3 = arith.constant 0 : index
    %c0_4 = arith.constant 0 : index
    %4 = vector.load %arg3[%c0_3, %c0_4] : memref<1x256xf32, #tpu.memory_space<vmem>>, vector<1x256xf32>
    %5 = vector.broadcast %4 : vector<1x256xf32> to vector<16x256xf32>
    %6 = arith.addf %3, %5 : vector<16x256xf32>
    %7 = vector.extract_strided_slice %6 {offsets = [0, 0], sizes = [16, 128], strides = [1, 1]} : vector<16x256xf32> to vector<16x128xf32>
    %8 = vector.extract_strided_slice %6 {offsets = [0, 128], sizes = [16, 128], strides = [1, 1]} : vector<16x256xf32> to vector<16x128xf32>
    %cst_5 = arith.constant 5.000000e-01 : f32
    %9 = vector.broadcast %cst_5 : f32 to vector<16x128xf32>
    %10 = arith.mulf %9, %7 : vector<16x128xf32>
    %cst_6 = arith.constant 0.707106769 : f32
    %11 = vector.broadcast %cst_6 : f32 to vector<16x128xf32>
    %12 = arith.mulf %7, %11 : vector<16x128xf32>
    %13 = math.erf %12 : vector<16x128xf32>
    %cst_7 = arith.constant 1.000000e+00 : f32
    %14 = vector.broadcast %cst_7 : f32 to vector<16x128xf32>
    %15 = arith.addf %14, %13 : vector<16x128xf32>
    %16 = arith.mulf %10, %15 : vector<16x128xf32>
    %17 = arith.negf %8 : vector<16x128xf32>
    %18 = math.exp %17 : vector<16x128xf32>
    %cst_8 = arith.constant 1.000000e+00 : f32
    %19 = vector.broadcast %cst_8 : f32 to vector<16x128xf32>
    %20 = arith.addf %19, %18 : vector<16x128xf32>
    %21 = arith.divf %19, %20 : vector<16x128xf32>
    %22 = arith.mulf %16, %21 : vector<16x128xf32>
    %c0_9 = arith.constant 0 : index
    %c0_10 = arith.constant 0 : index
    %23 = vector.load %arg4[%c0_9, %c0_10] : memref<16x128xf32, #tpu.memory_space<vmem>>, vector<16x128xf32>
    tpu.vector_store %arg4[%c0_9, %c0_10], %22 {strides = array<i32>} : memref<16x128xf32, #tpu.memory_space<vmem>>, vector<16x128xf32>,
    return
  }
  func.func @transform_0(%arg0: i32) -> (i32, i32) {
    %c0_i32 = arith.constant 0 : i32
    %c0_i32_0 = arith.constant 0 : i32
    return %arg0, %c0_i32 : i32, i32
  }
  func.func @transform_1(%arg0: i32) -> (i32, i32) {
    %c0_i32 = arith.constant 0 : i32
    %c0_i32_0 = arith.constant 0 : i32
    %c0_i32_1 = arith.constant 0 : i32
    return %c0_i32, %c0_i32_0 : i32, i32
  }
  func.func @transform_2(%arg0: i32) -> (i32, i32) {
    %c0_i32 = arith.constant 0 : i32
    %c0_i32_0 = arith.constant 0 : i32
    %c0_i32_1 = arith.constant 0 : i32
    return %c0_i32, %c0_i32_0 : i32, i32
  }
  func.func @transform_3(%arg0: i32) -> (i32, i32) {
    %c0_i32 = arith.constant 0 : i32
    %c0_i32_0 = arith.constant 0 : i32
    return %arg0, %c0_i32 : i32, i32
  }
}

</mosaic_0001>

<llo_original>
// kernel: selective_linear.1
$region0: #{selective_linear.1}
  #allocation0 [shape = 'u32[]', space=smem, size = 0x4, offset = 0x4, fixed_abs, tag = 'smem constant byte address 0x4 - core index']
  #allocation1 [shape = 'u32[144,128]{1,0:T(1,128)}', space=vmem, size = 0x12000, scoped, tag = 'internal scratch']
  %s0 = inlined_call_operand.hbm [shape: f32[16,32], index: 0, kind: input, shape index: {}]
  %s1 = inlined_call_operand.hbm [shape: bf16[32,256], index: 1, kind: input, shape index: {}]
  %s2 = inlined_call_operand.vmem [shape: f32[1,256], index: 2, kind: input, shape index: {}]
  %s3 = inlined_call_operand.vmem [shape: f32[16,128], index: 3, kind: output, shape index: {}]
  %s4 = sld [smem:[#allocation0]]
  $region30: #{selective_linear.1} parent=0
    _
  %s6 = ssub.s32 1, %s4
  %s7 = scalar_select 0, %s6, %s4
  $region1: #{selective_linear.1} parent=0
    #allocation2 [shape = 'u8[8192]{0}', space=vmem, size = 0x2000, scoped, tag = 'input window, operand 0, single buffered']
    #allocation3 [shape = 's32[1]{0}', space=sflag, size = 0x4, scoped, tag = 'scoped memory for selective_linear.1']
    #allocation4 [shape = 'u8[16384]{0}', space=vmem, size = 0x4000, scoped, tag = 'input window, operand 1, single buffered']
    #allocation5 [shape = 's32[1]{0}', space=sflag, size = 0x4, scoped, tag = 'scoped memory for selective_linear.1']
    %8 = vsyncpa [#allocation3], 0
    %9 = vsyncpa [#allocation5], 0
    // Predicated region
    $region2: #{selective_linear.1} parent=1 // pred_check
      _
    $region3: #{selective_linear.1} parent=1 // pred_check_branch
      %11 = sbr.rel (0) target = $region5
    $region4: #{selective_linear.1} parent=1 // pred_region
      %s13 = ssub.s32 256, 256
      %14 = vsyncadd [#allocation3], %s13
      %s15 = sshll.u32 [#allocation2], 4
      %s16 = int_to_ptr.vmem [resolvable:$true] %s15
      %21 = dma.hbm_to_vmem [thread:$0]  %s0, 256, %s16, [#allocation3], 128, 128, 8
    $region5: #{selective_linear.1} parent=1 // pred_fallthru
      _
    // Predicated region
    $region6: #{selective_linear.1} parent=1 // pred_check
      _
    $region7: #{selective_linear.1} parent=1 // pred_check_branch
      %23 = sbr.rel (0) target = $region9
    $region8: #{selective_linear.1} parent=1 // pred_region
      %s25 = ssub.s32 512, 512
      %26 = vsyncadd [#allocation5], %s25
      %s27 = sshll.u32 [#allocation4], 4
      %s28 = int_to_ptr.vmem [resolvable:$true] %s27
      %33 = dma.hbm_to_vmem [thread:$0]  %s1, 512, %s28, [#allocation5], 128, 128, 8
    $region9: #{selective_linear.1} parent=1 // pred_fallthru
      _
    // Predicated region
    $region10: #{selective_linear.1} parent=1 // pred_check
      _
    $region11: #{selective_linear.1} parent=1 // pred_check_branch
      %35 = sbr.rel (0) target = $region13
    $region12: #{selective_linear.1} parent=1 // pred_region
      _
    $region13: #{selective_linear.1} parent=1 // pred_fallthru
      _
    // Predicated region
    $region14: #{selective_linear.1} parent=1 // pred_check
      _
    $region15: #{selective_linear.1} parent=1 // pred_check_branch
      %37 = sbr.rel (0) target = $region17
    $region16: #{selective_linear.1} parent=1 // pred_region
      %38 = dma.done [#allocation3], 256
    $region17: #{selective_linear.1} parent=1 // pred_fallthru
      _
    // Predicated region
    $region18: #{selective_linear.1} parent=1 // pred_check
      _
    $region19: #{selective_linear.1} parent=1 // pred_check_branch
      %40 = sbr.rel (0) target = $region21
    $region20: #{selective_linear.1} parent=1 // pred_region
      %41 = dma.done [#allocation5], 512
    $region21: #{selective_linear.1} parent=1 // pred_fallthru
      _
    %v43 = vld [vmem:[#allocation2] sm:$0xff]
    %v44 = vld [vmem:[#allocation2 + $0x8] sm:$0xff]
    %v45 = vpack.c.bf16 %v44, %v43
    %v46 = vld [vmem:[#allocation4] sm:$0xff]
    %v47 = vld [vmem:[#allocation4 + $0x8] sm:$0xff]
    %v48 = vld [vmem:[#allocation4 + $0x10] sm:$0xff]
    %v49 = vld [vmem:[#allocation4 + $0x18] sm:$0xff]
    %v50 = vld [vmem:[%s2] sm:$0x3]
    %v52 = vlaneseq
    %v53 = vshrl.u32 %v52, 7
    %v54 = vsub.s32 0, %v53
    %v55 = vrot.slane %v50, %v54
    %v56 = vlaneseq
    %v57 = vshrl.u32 %v56, 7
    %v58 = vsub.s32 1, %v57
    %v59 = vrot.slane %v50, %v58
    %v66 = vunpack.c.l.b16 %v46
    %v67 = vunpack.c.h.b16 %v46
    %v68 = vunpack.c.l.b16 %v47
    %v69 = vunpack.c.h.b16 %v47
    %v70 = vunpack.c.l.b16 %v48
    %v71 = vunpack.c.h.b16 %v48
    %v72 = vunpack.c.l.b16 %v49
    %v73 = vunpack.c.h.b16 %v49
    %v74 = vpack.c.b16 %v68, %v66
    %v75 = vpack.c.b16 %v69, %v67
    %v76 = vpack.c.b16 %v72, %v70
    %v77 = vpack.c.b16 %v73, %v71
    %vm82 = vcmask 261120
    %v84 = vsel %vm82, %v45, 0
    %86 = vmatprep.subr.bf16.mxu0 %v75
    %87 = vmatpush1.bf16.msra.mxu0 %v74
    %88 = vmatprep.subr.bf16.mxu0 %v77
    %89 = vmatpush1.bf16.msra.mxu0 %v76
    %90 = vmatprep.subr.bf16.mxu0 0
    %91 = vmatpush1.bf16.msra.mxu0 0
    %92 = vmatprep.subr.bf16.mxu0 0
    %93 = vmatpush1.bf16.msra.mxu0 0
    %94 = vmatprep.subr.bf16.mxu0 0
    %95 = vmatpush1.bf16.msra.mxu0 0
    %96 = vmatprep.subr.bf16.mxu0 0
    %97 = vmatpush1.bf16.msra.mxu0 0
    %98 = vmatprep.subr.bf16.mxu0 0
    %99 = vmatpush1.bf16.msra.mxu0 0
    %100 = vmatprep.subr.bf16.mxu0 0
    %101 = vmatpush1.bf16.msra.mxu0 0
    %102 = vmatprep.subr.bf16.mxu0 0
    %103 = vmatpush1.bf16.msra.mxu0 0
    %104 = vmatprep.subr.bf16.mxu0 0
    %105 = vmatpush1.bf16.msra.mxu0 0
    %106 = vmatprep.subr.bf16.mxu0 0
    %107 = vmatpush1.bf16.msra.mxu0 0
    %108 = vmatprep.subr.bf16.mxu0 0
    %109 = vmatpush1.bf16.msra.mxu0 0
    %110 = vmatprep.subr.bf16.mxu0 0
    %111 = vmatpush1.bf16.msra.mxu0 0
    %112 = vmatprep.subr.bf16.mxu0 0
    %113 = vmatpush1.bf16.msra.mxu0 0
    %114 = vmatprep.subr.bf16.mxu0 0
    %115 = vmatpush1.bf16.msra.mxu0 0
    %116 = vmatprep.subr.bf16.mxu0 0
    %117 = vmatpush1.bf16.msra.mxu0 0
    %118 = vmatprep.mubr.bf16.mxu0 0
    %119 = vmatmul.mubr.bf16.gmra.mrb[0].mxu0 %v84
    %v120 = vpop.f32.mrb[0].mxu0
    %v121 = vadd.f32 %v55, %v120
    %v122 = vpop.f32.mrb[0].mxu0
    %v123 = vadd.f32 %v59, %v122
    %v124 = vpop.f32.mrb[0].mxu0
    %v125 = vadd.f32 %v55, %v124
    %v126 = vpop.f32.mrb[0].mxu0
    %v127 = vadd.f32 %v59, %v126
    %128 = vdwg.mxu0
    %v129 = vmul.f32 %v121, 0.5
    %v130 = vmul.f32 %v125, 0.5
    %v131 = vmul.f32 %v121, 0.70710677
    %v132 = vmul.f32 %v125, 0.70710677
    %v133 = verf.f32.pop %v131
    %v134 = verf.f32.pop %v132
    %v135 = vadd.f32 %v133, 1.0
    %v136 = vadd.f32 %v134, 1.0
    %v137 = vmul.f32 %v129, %v135
    %v138 = vmul.f32 %v130, %v136
    %v139 = vxor.u32 %v123, 2147483648
    %v140 = vxor.u32 %v127, 2147483648
    %v141 = vmul.f32 %v139, 1.442695
    %v142 = vpow.pop %v141
    %v143 = vmul.f32 %v140, 1.442695
    %v144 = vpow.pop %v143
    %v145 = vadd.f32 %v142, 1.0
    %v146 = vadd.f32 %v144, 1.0
    %v147 = vrcp.pop %v145
    %v148 = vmul.f32 1.0, %v147
    %v149 = vrcp.pop %v146
    %v150 = vmul.f32 1.0, %v149
    %v151 = vmul.f32 %v137, %v148
    %v152 = vmul.f32 %v138, %v150
    %153 = vst [vmem:[%s3] sm:$0xff] %v151
    %154 = vst [vmem:[%s3 + $0x8] sm:$0xff] %v152
    // Predicated region
    $region22: #{selective_linear.1} parent=1 // pred_check
      _
    $region23: #{selective_linear.1} parent=1 // pred_check_branch
      %156 = sbr.rel (0) target = $region25
    $region24: #{selective_linear.1} parent=1 // pred_region
      _
    $region25: #{selective_linear.1} parent=1 // pred_fallthru
      _
    // Predicated region
    $region26: #{selective_linear.1} parent=1 // pred_check
      _
    $region27: #{selective_linear.1} parent=1 // pred_check_branch
      %158 = sbr.rel (0) target = $region29
    $region28: #{selective_linear.1} parent=1 // pred_region
      _
    $region29: #{selective_linear.1} parent=1 // pred_fallthru
      _
    %159 = vsyncpa [#allocation3], 1
    %160 = vsyncpa [#allocation5], 1

</llo_original>
